<compile_context>
chip_gen: v7x
topology: tpu7x:2x2x1
jax: 0.10.0
libtpu: 0.0.40
codegen_flags: <defaults>
</compile_context>

<pallas_src>
import functools

import jax
import jax.numpy as jnp
from jax import lax
from jax.experimental import pallas as pl
from jax.experimental.pallas import tpu as pltpu


def _round_up(a, b):
    return ((a + b - 1) // b) * b


# ---------------------------------------------------------------------------
# Pass 1: conv (MXU matmul) + bias + LeakyReLU + streaming BN statistics.
# ---------------------------------------------------------------------------
def _conv_lrelu_stats_kernel(p_ref, w_ref, b_ref, y_ref, mean_ref, istd_ref, *,
                             m_true, tile_m, mask_pad_rows, eps, neg_slope):
    i = pl.program_id(1)            # M-tile index (innermost, "arbitrary")
    n_m = pl.num_programs(1)

    # Conv as matmul: bf16 inputs, f32 accumulation on the MXU.
    y = jnp.dot(p_ref[...], w_ref[...], preferred_element_type=jnp.float32)
    y = y + b_ref[...]
    # LeakyReLU(0.2)
    y = jnp.where(y >= 0, y, neg_slope * y)
    y_ref[...] = y.astype(y_ref.dtype)

    # Per-channel statistics (training-mode BatchNorm).  Padded rows (from
    # rounding M up to the tile size) must not contribute to the stats.
    if mask_pad_rows:
        row = i * tile_m + lax.broadcasted_iota(jnp.int32, (tile_m, 1), 0)
        ym = jnp.where(row < m_true, y, 0.0)
    else:
        ym = y

    @pl.when(i == 0)
    def _init():
        mean_ref[...] = jnp.zeros_like(mean_ref)   # running sum
        istd_ref[...] = jnp.zeros_like(istd_ref)   # running sum of squares

    mean_ref[...] += jnp.sum(ym, axis=0, keepdims=True)
    istd_ref[...] += jnp.sum(ym * ym, axis=0, keepdims=True)

    @pl.when(i == n_m - 1)
    def _finalize():
        mean = mean_ref[...] / m_true
        var = istd_ref[...] / m_true - mean * mean   # biased var (PyTorch train BN)
        mean_ref[...] = mean
        istd_ref[...] = lax.rsqrt(var + eps)         # EUP rsqrt


# ---------------------------------------------------------------------------
# Pass 2: apply the batch-norm affine transform per tile (fully parallel).
# ---------------------------------------------------------------------------
def _bn_apply_kernel(y_ref, mean_ref, istd_ref, g_ref, be_ref, o_ref):
    y = y_ref[...]
    out = (y - mean_ref[...]) * istd_ref[...] * g_ref[...] + be_ref[...]
    o_ref[...] = out.astype(o_ref.dtype)


def conv_block(x, w, b, gamma, beta, *, stride=2, padding=1,
               tile_m=512, tile_cout=128, mxu_dtype=jnp.bfloat16,
               eps=1e-5, neg_slope=0.2):
    """ConvBlock forward.

    x: (N, Cin, H, W) f32, w: (Cout, Cin, KH, KW), b/gamma/beta: (Cout,).
    Returns (N, Cout, OH, OW) f32 (NCHW, matching the PyTorch module).
    """
    N, Cin, H, W = x.shape
    Cout, _, KH, KW = w.shape
    OH = (H + 2 * padding - KH) // stride + 1
    OW = (W + 2 * padding - KW) // stride + 1
    M = N * OH * OW
    K = Cin * KH * KW

    # --- im2col (host-side glue; emitted in bf16). TODO(synk): fuse in-kernel ---
    x_p = jnp.pad(x, ((0, 0), (0, 0), (padding, padding), (padding, padding)))
    cols = []
    for kh in range(KH):
        for kw in range(KW):
            cols.append(
                x_p[:, :, kh:kh + stride * OH:stride, kw:kw + stride * OW:stride])
    p = jnp.stack(cols, axis=0).reshape(KH, KW, N, Cin, OH, OW)
    # column order (cin, kh, kw) matches PyTorch's weight.reshape(Cout, -1)
    p = p.transpose(2, 4, 5, 3, 0, 1).reshape(M, K)

    # --- pad to lane/sublane-dense, tile-divisible shapes ---
    tile_m_eff = _round_up(min(tile_m, _round_up(M, 8)), 8)
    M_pad = _round_up(M, tile_m_eff)
    tile_cout = _round_up(tile_cout, 128)          # dense 128-lane output tiles
    Cout_pad = _round_up(Cout, tile_cout)
    n_m = M_pad // tile_m_eff
    n_c = Cout_pad // tile_cout

    p = jnp.pad(p, ((0, M_pad - M), (0, 0))).astype(mxu_dtype)
    w_mat = jnp.pad(w.reshape(Cout, K).T,
                    ((0, 0), (0, Cout_pad - Cout))).astype(mxu_dtype)
    cpad = ((0, 0), (0, Cout_pad - Cout))
    b2 = jnp.pad(b.reshape(1, Cout).astype(jnp.float32), cpad)
    g2 = jnp.pad(gamma.reshape(1, Cout).astype(jnp.float32), cpad)
    be2 = jnp.pad(beta.reshape(1, Cout).astype(jnp.float32), cpad)

    itm = jnp.dtype(mxu_dtype).itemsize

    # ----------------------- pass 1: conv + lrelu + stats ---------------------
    kernel1 = functools.partial(
        _conv_lrelu_stats_kernel, m_true=M, tile_m=tile_m_eff,
        mask_pad_rows=(M_pad != M), eps=eps, neg_slope=neg_slope)
    cost1 = pl.CostEstimate(
        flops=2 * M_pad * K * Cout_pad,
        transcendentals=0,
        bytes_accessed=((M_pad * K + K * Cout_pad) * itm
                        + (M_pad * Cout_pad + 3 * Cout_pad) * 4))
    y_act, bn_mean, bn_istd = pl.pallas_call(
        kernel1,
        out_shape=(jax.ShapeDtypeStruct((M_pad, Cout_pad), jnp.float32),
                   jax.ShapeDtypeStruct((1, Cout_pad), jnp.float32),
                   jax.ShapeDtypeStruct((1, Cout_pad), jnp.float32)),
        grid_spec=pltpu.PrefetchScalarGridSpec(
            num_scalar_prefetch=0,
            grid=(n_c, n_m),
            in_specs=[
                pl.BlockSpec((tile_m_eff, K), lambda c, i: (i, 0)),
                pl.BlockSpec((K, tile_cout), lambda c, i: (0, c)),
                pl.BlockSpec((1, tile_cout), lambda c, i: (0, c)),
            ],
            out_specs=[
                pl.BlockSpec((tile_m_eff, tile_cout), lambda c, i: (i, c)),
                pl.BlockSpec((1, tile_cout), lambda c, i: (0, c)),
                pl.BlockSpec((1, tile_cout), lambda c, i: (0, c)),
            ]),
        compiler_params=pltpu.CompilerParams(
            dimension_semantics=("parallel", "arbitrary"),
            vmem_limit_bytes=32 * 1024 * 1024),
        cost_estimate=cost1,
    )(p, w_mat, b2)

    # ----------------------- pass 2: apply batch norm -------------------------
    cost2 = pl.CostEstimate(
        flops=4 * M_pad * Cout_pad,
        transcendentals=0,
        bytes_accessed=2 * M_pad * Cout_pad * 4 + 4 * Cout_pad * 4)
    out = pl.pallas_call(
        _bn_apply_kernel,
        out_shape=jax.ShapeDtypeStruct((M_pad, Cout_pad), jnp.float32),
        grid_spec=pltpu.PrefetchScalarGridSpec(
            num_scalar_prefetch=0,
            grid=(n_c, n_m),
            in_specs=[
                pl.BlockSpec((tile_m_eff, tile_cout), lambda c, i: (i, c)),
                pl.BlockSpec((1, tile_cout), lambda c, i: (0, c)),
                pl.BlockSpec((1, tile_cout), lambda c, i: (0, c)),
                pl.BlockSpec((1, tile_cout), lambda c, i: (0, c)),
                pl.BlockSpec((1, tile_cout), lambda c, i: (0, c)),
            ],
            out_specs=pl.BlockSpec((tile_m_eff, tile_cout), lambda c, i: (i, c))),
        compiler_params=pltpu.CompilerParams(
            dimension_semantics=("parallel", "parallel"),
            vmem_limit_bytes=32 * 1024 * 1024),
        cost_estimate=cost2,
    )(y_act, bn_mean, bn_istd, g2, be2)

    out = out[:M, :Cout].reshape(N, OH, OW, Cout)
    # NCHW to match the PyTorch module (drop this transpose if the consumer
    # can take NHWC).
    return out.transpose(0, 3, 1, 2)


def _reference(x, w, b, gamma, beta, *, stride=2, padding=1, cast_dtype=None,
               eps=1e-5, neg_slope=0.2):
    """Pure-JAX reference mirroring the PyTorch ConvBlock forward (train mode).

    `cast_dtype` optionally rounds the conv inputs through bf16 exactly like
    the kernel's MXU path (f32 accumulation in both), for a tight comparison.
    """
    if cast_dtype is not None:
        x = x.astype(cast_dtype).astype(jnp.float32)
        w = w.astype(cast_dtype).astype(jnp.float32)
    y = lax.conv_general_dilated(
        x, w, window_strides=(stride, stride),
        padding=((padding, padding), (padding, padding)),
        dimension_numbers=("NCHW", "OIHW", "NCHW"),
        precision=lax.Precision.HIGHEST,
        preferred_element_type=jnp.float32,
    ) + b.reshape(1, -1, 1, 1)
    y = jnp.where(y >= 0, y, neg_slope * y)
    mean = jnp.mean(y, axis=(0, 2, 3), keepdims=True)
    var = jnp.mean((y - mean) ** 2, axis=(0, 2, 3), keepdims=True)
    y = (y - mean) * lax.rsqrt(var + eps)
    return y * gamma.reshape(1, -1, 1, 1) + beta.reshape(1, -1, 1, 1)


if __name__ == "__main__":
    key = jax.random.PRNGKey(0)
    k_x, k_w, k_b = jax.random.split(key, 3)

    N, Cin, H, W = 2, 4, 16, 16
    Cout, KH, KW = 8, 4, 4

    x = jax.random.normal(k_x, (N, Cin, H, W), dtype=jnp.float32)
    fan_in = Cin * KH * KW
    w = jax.random.normal(k_w, (Cout, Cin, KH, KW), dtype=jnp.float32) / jnp.sqrt(fan_in)
    b = jax.random.normal(k_b, (Cout,), dtype=jnp.float32) * 0.1
    gamma = jnp.ones((Cout,), dtype=jnp.float32)   # BatchNorm2d default weight
    beta = jnp.zeros((Cout,), dtype=jnp.float32)   # BatchNorm2d default bias

    fwd = jax.jit(conv_block)
    out = jax.block_until_ready(fwd(x, w, b, gamma, beta))

    assert out.shape == (N, Cout, H // 2, W // 2), out.shape

    # Compare against a reference whose conv inputs go through the same bf16
    # rounding as the kernel's MXU path (f32 accumulation in both).
    ref = _reference(x, w, b, gamma, beta, cast_dtype=jnp.bfloat16)
    max_err = float(jnp.max(jnp.abs(out - ref)))
    assert jnp.allclose(out, ref, atol=2e-3, rtol=2e-3), max_err

    print("KERNEL_OK")
</pallas_src>

<mosaic_0001>
module attributes {stable_mosaic.version = 11 : i64} {
  func.func @_bn_apply_kernel(%arg0: i32, %arg1: i32, %arg2: memref<128x128xf32, #tpu.memory_space<vmem>>, %arg3: memref<1x128xf32, #tpu.memory_space<vmem>>, %arg4: memref<1x128xf32, #tpu.memory_space<vmem>>, %arg5: memref<1x128xf32, #tpu.memory_space<vmem>>, %arg6: memref<1x128xf32, #tpu.memory_space<vmem>>, %arg7: memref<128x128xf32, #tpu.memory_space<vmem>>) attributes {dimension_semantics = [#tpu.dimension_semantics<parallel>, #tpu.dimension_semantics<parallel>], iteration_bounds = array<i64: 1, 1>, scalar_prefetch = 0 : i64, scratch_operands = 0 : i64, tpu.core_type = #tpu.core_type<tc>, window_params = [{transform_indices = @transform_0, window_bounds = array<i64: 128, 128>}, {transform_indices = @transform_1, window_bounds = array<i64: 1, 128>}, {transform_indices = @transform_2, window_bounds = array<i64: 1, 128>}, {transform_indices = @transform_3, window_bounds = array<i64: 1, 128>}, {transform_indices = @transform_4, window_bounds = array<i64: 1, 128>}, {transform_indices = @transform_5, window_bounds = array<i64: 128, 128>}]} {
    %c0 = arith.constant 0 : index
    %c0_0 = arith.constant 0 : index
    %0 = vector.load %arg2[%c0, %c0_0] : memref<128x128xf32, #tpu.memory_space<vmem>>, vector<128x128xf32>
    %c0_1 = arith.constant 0 : index
    %c0_2 = arith.constant 0 : index
    %1 = vector.load %arg3[%c0_1, %c0_2] : memref<1x128xf32, #tpu.memory_space<vmem>>, vector<1x128xf32>
    %2 = vector.broadcast %1 : vector<1x128xf32> to vector<128x128xf32>
    %3 = arith.subf %0, %2 : vector<128x128xf32>
    %c0_3 = arith.constant 0 : index
    %c0_4 = arith.constant 0 : index
    %4 = vector.load %arg4[%c0_3, %c0_4] : memref<1x128xf32, #tpu.memory_space<vmem>>, vector<1x128xf32>
    %5 = vector.broadcast %4 : vector<1x128xf32> to vector<128x128xf32>
    %6 = arith.mulf %3, %5 : vector<128x128xf32>
    %c0_5 = arith.constant 0 : index
    %c0_6 = arith.constant 0 : index
    %7 = vector.load %arg5[%c0_5, %c0_6] : memref<1x128xf32, #tpu.memory_space<vmem>>, vector<1x128xf32>
    %8 = vector.broadcast %7 : vector<1x128xf32> to vector<128x128xf32>
    %9 = arith.mulf %6, %8 : vector<128x128xf32>
    %c0_7 = arith.constant 0 : index
    %c0_8 = arith.constant 0 : index
    %10 = vector.load %arg6[%c0_7, %c0_8] : memref<1x128xf32, #tpu.memory_space<vmem>>, vector<1x128xf32>
    %11 = vector.broadcast %10 : vector<1x128xf32> to vector<128x128xf32>
    %12 = arith.addf %9, %11 : vector<128x128xf32>
    %c0_9 = arith.constant 0 : index
    %c0_10 = arith.constant 0 : index
    %13 = vector.load %arg7[%c0_9, %c0_10] : memref<128x128xf32, #tpu.memory_space<vmem>>, vector<128x128xf32>
    tpu.vector_store %arg7[%c0_9, %c0_10], %12 {strides = array<i32>} : memref<128x128xf32, #tpu.memory_space<vmem>>, vector<128x128xf32>,
    return
  }
  func.func @transform_0(%arg0: i32, %arg1: i32) -> (i32, i32) {
    %c0_i32 = arith.constant 0 : i32
    return %arg1, %arg0 : i32, i32
  }
  func.func @transform_1(%arg0: i32, %arg1: i32) -> (i32, i32) {
    %c0_i32 = arith.constant 0 : i32
    %c0_i32_0 = arith.constant 0 : i32
    return %c0_i32, %arg0 : i32, i32
  }
  func.func @transform_2(%arg0: i32, %arg1: i32) -> (i32, i32) {
    %c0_i32 = arith.constant 0 : i32
    %c0_i32_0 = arith.constant 0 : i32
    return %c0_i32, %arg0 : i32, i32
  }
  func.func @transform_3(%arg0: i32, %arg1: i32) -> (i32, i32) {
    %c0_i32 = arith.constant 0 : i32
    %c0_i32_0 = arith.constant 0 : i32
    return %c0_i32, %arg0 : i32, i32
  }
  func.func @transform_4(%arg0: i32, %arg1: i32) -> (i32, i32) {
    %c0_i32 = arith.constant 0 : i32
    %c0_i32_0 = arith.constant 0 : i32
    return %c0_i32, %arg0 : i32, i32
  }
  func.func @transform_5(%arg0: i32, %arg1: i32) -> (i32, i32) {
    %c0_i32 = arith.constant 0 : i32
    return %arg1, %arg0 : i32, i32
  }
}

module attributes {stable_mosaic.version = 11 : i64} {
  func.func @_conv_lrelu_stats_kernel(%arg0: i32, %arg1: i32, %arg2: memref<128x64xbf16, #tpu.memory_space<vmem>>, %arg3: memref<64x128xbf16, #tpu.memory_space<vmem>>, %arg4: memref<1x128xf32, #tpu.memory_space<vmem>>, %arg5: memref<128x128xf32, #tpu.memory_space<vmem>>, %arg6: memref<1x128xf32, #tpu.memory_space<vmem>>, %arg7: memref<1x128xf32, #tpu.memory_space<vmem>>) attributes {dimension_semantics = [#tpu.dimension_semantics<parallel>, #tpu.dimension_semantics<arbitrary>], iteration_bounds = array<i64: 1, 1>, scalar_prefetch = 0 : i64, scratch_operands = 0 : i64, tpu.core_type = #tpu.core_type<tc>, window_params = [{transform_indices = @transform_0, window_bounds = array<i64: 128, 64>}, {transform_indices = @transform_1, window_bounds = array<i64: 64, 128>}, {transform_indices = @transform_2, window_bounds = array<i64: 1, 128>}, {transform_indices = @transform_3, window_bounds = array<i64: 128, 128>}, {transform_indices = @transform_4, window_bounds = array<i64: 1, 128>}, {transform_indices = @transform_5, window_bounds = array<i64: 1, 128>}]} {
    %c0 = arith.constant 0 : index
    %c0_0 = arith.constant 0 : index
    %0 = vector.load %arg2[%c0, %c0_0] : memref<128x64xbf16, #tpu.memory_space<vmem>>, vector<128x64xbf16>
    %c0_1 = arith.constant 0 : index
    %c0_2 = arith.constant 0 : index
    %1 = vector.load %arg3[%c0_1, %c0_2] : memref<64x128xbf16, #tpu.memory_space<vmem>>, vector<64x128xbf16>
    %cst = arith.constant dense<0.000000e+00> : vector<128x128xf32>
    %2 = tpu.matmul %0, %1, %cst {dimension_numbers = #tpu.dot_dimension_numbers<[1], [0], [0], [1], [0, 0, 1, 1], [], []>} : vector<128x64xbf16>, vector<64x128xbf16>, vector<128x128xf32> -> vector<128x128xf32>
    %c0_3 = arith.constant 0 : index
    %c0_4 = arith.constant 0 : index
    %3 = vector.load %arg4[%c0_3, %c0_4] : memref<1x128xf32, #tpu.memory_space<vmem>>, vector<1x128xf32>
    %4 = vector.broadcast %3 : vector<1x128xf32> to vector<128x128xf32>
    %5 = arith.addf %2, %4 : vector<128x128xf32>
    %cst_5 = arith.constant 0.000000e+00 : f32
    %6 = vector.broadcast %cst_5 : f32 to vector<128x128xf32>
    %7 = arith.cmpf oge, %5, %6 : vector<128x128xf32>
    %cst_6 = arith.constant 2.000000e-01 : f32
    %8 = vector.broadcast %cst_6 : f32 to vector<128x128xf32>
    %9 = arith.mulf %8, %5 : vector<128x128xf32>
    %10 = arith.select %7, %5, %9 : vector<128x128xi1>, vector<128x128xf32>
    %c0_7 = arith.constant 0 : index
    %c0_8 = arith.constant 0 : index
    %11 = vector.load %arg5[%c0_7, %c0_8] : memref<128x128xf32, #tpu.memory_space<vmem>>, vector<128x128xf32>
    tpu.vector_store %arg5[%c0_7, %c0_8], %10 {strides = array<i32>} : memref<128x128xf32, #tpu.memory_space<vmem>>, vector<128x128xf32>,
    %c0_i32 = arith.constant 0 : i32
    %12 = arith.cmpi eq, %arg1, %c0_i32 : i32
    %13 = arith.extui %12 : i1 to i32
    %c0_i32_9 = arith.constant 0 : i32
    %14 = arith.cmpi ne, %13, %c0_i32_9 : i32
    scf.if %14 {
      %cst_22 = arith.constant 0.000000e+00 : f32
      %29 = vector.broadcast %cst_22 : f32 to vector<1x128xf32>
      %c0_23 = arith.constant 0 : index
      %c0_24 = arith.constant 0 : index
      %30 = vector.load %arg6[%c0_23, %c0_24] : memref<1x128xf32, #tpu.memory_space<vmem>>, vector<1x128xf32>
      tpu.vector_store %arg6[%c0_23, %c0_24], %29 {strides = array<i32>} : memref<1x128xf32, #tpu.memory_space<vmem>>, vector<1x128xf32>,
      %cst_25 = arith.constant 0.000000e+00 : f32
      %31 = vector.broadcast %cst_25 : f32 to vector<1x128xf32>
      %c0_26 = arith.constant 0 : index
      %c0_27 = arith.constant 0 : index
      %32 = vector.load %arg7[%c0_26, %c0_27] : memref<1x128xf32, #tpu.memory_space<vmem>>, vector<1x128xf32>
      tpu.vector_store %arg7[%c0_26, %c0_27], %31 {strides = array<i32>} : memref<1x128xf32, #tpu.memory_space<vmem>>, vector<1x128xf32>,
    } else {
    }
    %c0_10 = arith.constant 0 : index
    %c0_11 = arith.constant 0 : index
    %15 = vector.load %arg6[%c0_10, %c0_11] : memref<1x128xf32, #tpu.memory_space<vmem>>, vector<1x128xf32>
    %cst_12 = arith.constant dense<0.000000e+00> : vector<128xf32>
    %16 = vector.multi_reduction <add>, %10, %cst_12 [0] : vector<128x128xf32> to vector<128xf32>
    %17 = vector.shape_cast %16 : vector<128xf32> to vector<1x128xf32>
    %18 = arith.addf %15, %17 : vector<1x128xf32>
    %c0_13 = arith.constant 0 : index
    %c0_14 = arith.constant 0 : index
    %19 = vector.load %arg6[%c0_13, %c0_14] : memref<1x128xf32, #tpu.memory_space<vmem>>, vector<1x128xf32>
    tpu.vector_store %arg6[%c0_13, %c0_14], %18 {strides = array<i32>} : memref<1x128xf32, #tpu.memory_space<vmem>>, vector<1x128xf32>,
    %c0_15 = arith.constant 0 : index
    %c0_16 = arith.constant 0 : index
    %20 = vector.load %arg7[%c0_15, %c0_16] : memref<1x128xf32, #tpu.memory_space<vmem>>, vector<1x128xf32>
    %21 = arith.mulf %10, %10 : vector<128x128xf32>
    %cst_17 = arith.constant dense<0.000000e+00> : vector<128xf32>
    %22 = vector.multi_reduction <add>, %21, %cst_17 [0] : vector<128x128xf32> to vector<128xf32>
    %23 = vector.shape_cast %22 : vector<128xf32> to vector<1x128xf32>
    %24 = arith.addf %20, %23 : vector<1x128xf32>
    %c0_18 = arith.constant 0 : index
    %c0_19 = arith.constant 0 : index
    %25 = vector.load %arg7[%c0_18, %c0_19] : memref<1x128xf32, #tpu.memory_space<vmem>>, vector<1x128xf32>
    tpu.vector_store %arg7[%c0_18, %c0_19], %24 {strides = array<i32>} : memref<1x128xf32, #tpu.memory_space<vmem>>, vector<1x128xf32>,
    %c0_i32_20 = arith.constant 0 : i32
    %26 = arith.cmpi eq, %arg1, %c0_i32_20 : i32
    %27 = arith.extui %26 : i1 to i32
    %c0_i32_21 = arith.constant 0 : i32
    %28 = arith.cmpi ne, %27, %c0_i32_21 : i32
    scf.if %28 {
      %c0_22 = arith.constant 0 : index
      %c0_23 = arith.constant 0 : index
      %29 = vector.load %arg6[%c0_22, %c0_23] : memref<1x128xf32, #tpu.memory_space<vmem>>, vector<1x128xf32>
      %cst_24 = arith.constant 1.280000e+02 : f32
      %30 = vector.broadcast %cst_24 : f32 to vector<1x128xf32>
      %31 = arith.divf %29, %30 : vector<1x128xf32>
      %c0_25 = arith.constant 0 : index
      %c0_26 = arith.constant 0 : index
      %32 = vector.load %arg7[%c0_25, %c0_26] : memref<1x128xf32, #tpu.memory_space<vmem>>, vector<1x128xf32>
      %cst_27 = arith.constant 1.280000e+02 : f32
      %33 = vector.broadcast %cst_27 : f32 to vector<1x128xf32>
      %34 = arith.divf %32, %33 : vector<1x128xf32>
      %35 = arith.mulf %31, %31 : vector<1x128xf32>
      %36 = arith.subf %34, %35 : vector<1x128xf32>
      %c0_28 = arith.constant 0 : index
      %c0_29 = arith.constant 0 : index
      %37 = vector.load %arg6[%c0_28, %c0_29] : memref<1x128xf32, #tpu.memory_space<vmem>>, vector<1x128xf32>
      tpu.vector_store %arg6[%c0_28, %c0_29], %31 {strides = array<i32>} : memref<1x128xf32, #tpu.memory_space<vmem>>, vector<1x128xf32>,
      %cst_30 = arith.constant 9.99999974E-6 : f32
      %38 = vector.broadcast %cst_30 : f32 to vector<1x128xf32>
      %39 = arith.addf %36, %38 : vector<1x128xf32>
      %40 = math.rsqrt %39 : vector<1x128xf32>
      %c0_31 = arith.constant 0 : index
      %c0_32 = arith.constant 0 : index
      %41 = vector.load %arg7[%c0_31, %c0_32] : memref<1x128xf32, #tpu.memory_space<vmem>>, vector<1x128xf32>
      tpu.vector_store %arg7[%c0_31, %c0_32], %40 {strides = array<i32>} : memref<1x128xf32, #tpu.memory_space<vmem>>, vector<1x128xf32>,
    } else {
    }
    return
  }
  func.func @transform_0(%arg0: i32, %arg1: i32) -> (i32, i32) {
    %c0_i32 = arith.constant 0 : i32
    %c0_i32_0 = arith.constant 0 : i32
    return %arg1, %c0_i32 : i32, i32
  }
  func.func @transform_1(%arg0: i32, %arg1: i32) -> (i32, i32) {
    %c0_i32 = arith.constant 0 : i32
    %c0_i32_0 = arith.constant 0 : i32
    return %c0_i32, %arg0 : i32, i32
  }
  func.func @transform_2(%arg0: i32, %arg1: i32) -> (i32, i32) {
    %c0_i32 = arith.constant 0 : i32
    %c0_i32_0 = arith.constant 0 : i32
    return %c0_i32, %arg0 : i32, i32
  }
  func.func @transform_3(%arg0: i32, %arg1: i32) -> (i32, i32) {
    %c0_i32 = arith.constant 0 : i32
    return %arg1, %arg0 : i32, i32
  }
  func.func @transform_4(%arg0: i32, %arg1: i32) -> (i32, i32) {
    %c0_i32 = arith.constant 0 : i32
    %c0_i32_0 = arith.constant 0 : i32
    return %c0_i32, %arg0 : i32, i32
  }
  func.func @transform_5(%arg0: i32, %arg1: i32) -> (i32, i32) {
    %c0_i32 = arith.constant 0 : i32
    %c0_i32_0 = arith.constant 0 : i32
    return %c0_i32, %arg0 : i32, i32
  }
}

</mosaic_0001>

<llo_original>
// kernel: conv_block.3
$region0: #{conv_block.3}
  #allocation0 [shape = 'u32[]', space=smem, size = 0x4, offset = 0x4, fixed_abs, tag = 'smem constant byte address 0x4 - core index']
  #allocation1 [shape = 'u32[144,128]{1,0:T(1,128)}', space=vmem, size = 0x12000, scoped, tag = 'internal scratch']
  %s0 = inlined_call_operand.vmem [shape: f32[128,128], index: 0, kind: input, shape index: {}]
  %s1 = inlined_call_operand.vmem [shape: f32[1,128], index: 1, kind: input, shape index: {}]
  %s2 = inlined_call_operand.vmem [shape: f32[1,128], index: 2, kind: input, shape index: {}]
  %s3 = inlined_call_operand.vmem [shape: f32[1,128], index: 3, kind: input, shape index: {}]
  %s4 = inlined_call_operand.vmem [shape: f32[1,128], index: 4, kind: input, shape index: {}]
  %s5 = inlined_call_operand.vmem [shape: f32[128,128], index: 5, kind: output, shape index: {}]
  %s6 = sld [smem:[#allocation0]]
  $region30: #{conv_block.3} parent=0
    _
  %s8 = ssub.s32 1, %s6
  %s9 = scalar_select 0, %s8, %s6
  // Predicated region
  $region2: #{conv_block.3} parent=0 // pred_check
    _
  $region3: #{conv_block.3} parent=0 // pred_check_branch
    %11 = sbr.rel (0) target = $region5
  $region4: #{conv_block.3} parent=0 // pred_region
    _
  $region5: #{conv_block.3} parent=0 // pred_fallthru
    _
  // Predicated region
  $region6: #{conv_block.3} parent=0 // pred_check
    _
  $region7: #{conv_block.3} parent=0 // pred_check_branch
    %13 = sbr.rel (0) target = $region9
  $region8: #{conv_block.3} parent=0 // pred_region
    _
  $region9: #{conv_block.3} parent=0 // pred_fallthru
    _
  // Predicated region
  $region10: #{conv_block.3} parent=0 // pred_check
    _
  $region11: #{conv_block.3} parent=0 // pred_check_branch
    %15 = sbr.rel (0) target = $region13
  $region12: #{conv_block.3} parent=0 // pred_region
    _
  $region13: #{conv_block.3} parent=0 // pred_fallthru
    _
  // Predicated region
  $region14: #{conv_block.3} parent=0 // pred_check
    _
  $region15: #{conv_block.3} parent=0 // pred_check_branch
    %17 = sbr.rel (0) target = $region17
  $region16: #{conv_block.3} parent=0 // pred_region
    _
  $region17: #{conv_block.3} parent=0 // pred_fallthru
    _
  // Predicated region
  $region18: #{conv_block.3} parent=0 // pred_check
    _
  $region19: #{conv_block.3} parent=0 // pred_check_branch
    %19 = sbr.rel (0) target = $region21
  $region20: #{conv_block.3} parent=0 // pred_region
    _
  $region21: #{conv_block.3} parent=0 // pred_fallthru
    _
  %v20 = vld [vmem:[%s0] sm:$0xff]
  %v21 = vld [vmem:[%s0 + $0x8] sm:$0xff]
  %v22 = vld [vmem:[%s0 + $0x10] sm:$0xff]
  %v23 = vld [vmem:[%s0 + $0x18] sm:$0xff]
  %v24 = vld [vmem:[%s0 + $0x20] sm:$0xff]
  %v25 = vld [vmem:[%s0 + $0x28] sm:$0xff]
  %v26 = vld [vmem:[%s0 + $0x30] sm:$0xff]
  %v27 = vld [vmem:[%s0 + $0x38] sm:$0xff]
  %v28 = vld [vmem:[%s0 + $0x40] sm:$0xff]
  %v29 = vld [vmem:[%s0 + $0x48] sm:$0xff]
  %v30 = vld [vmem:[%s0 + $0x50] sm:$0xff]
  %v31 = vld [vmem:[%s0 + $0x58] sm:$0xff]
  %v32 = vld [vmem:[%s0 + $0x60] sm:$0xff]
  %v33 = vld [vmem:[%s0 + $0x68] sm:$0xff]
  %v34 = vld [vmem:[%s0 + $0x70] sm:$0xff]
  %v35 = vld [vmem:[%s0 + $0x78] sm:$0xff]
  %v36 = vld [vmem:[%s1] sm:$0x1]
  %v38 = vlaneseq
  %v39 = vshrl.u32 %v38, 7
  %v40 = vsub.s32 0, %v39
  %v41 = vrot.slane %v36, %v40
  %v43 = vsub.f32 %v20, %v41
  %v44 = vsub.f32 %v21, %v41
  %v45 = vsub.f32 %v22, %v41
  %v46 = vsub.f32 %v23, %v41
  %v47 = vsub.f32 %v24, %v41
  %v48 = vsub.f32 %v25, %v41
  %v49 = vsub.f32 %v26, %v41
  %v50 = vsub.f32 %v27, %v41
  %v51 = vsub.f32 %v28, %v41
  %v52 = vsub.f32 %v29, %v41
  %v53 = vsub.f32 %v30, %v41
  %v54 = vsub.f32 %v31, %v41
  %v55 = vsub.f32 %v32, %v41
  %v56 = vsub.f32 %v33, %v41
  %v57 = vsub.f32 %v34, %v41
  %v58 = vsub.f32 %v35, %v41
  %v59 = vld [vmem:[%s2] sm:$0x1]
  %v61 = vlaneseq
  %v62 = vshrl.u32 %v61, 7
  %v63 = vsub.s32 0, %v62
  %v64 = vrot.slane %v59, %v63
  %v66 = vmul.f32 %v43, %v64
  %v67 = vmul.f32 %v44, %v64
  %v68 = vmul.f32 %v45, %v64
  %v69 = vmul.f32 %v46, %v64
  %v70 = vmul.f32 %v47, %v64
  %v71 = vmul.f32 %v48, %v64
  %v72 = vmul.f32 %v49, %v64
  %v73 = vmul.f32 %v50, %v64
  %v74 = vmul.f32 %v51, %v64
  %v75 = vmul.f32 %v52, %v64
  %v76 = vmul.f32 %v53, %v64
  %v77 = vmul.f32 %v54, %v64
  %v78 = vmul.f32 %v55, %v64
  %v79 = vmul.f32 %v56, %v64
  %v80 = vmul.f32 %v57, %v64
  %v81 = vmul.f32 %v58, %v64
  %v82 = vld [vmem:[%s3] sm:$0x1]
  %v84 = vlaneseq
  %v85 = vshrl.u32 %v84, 7
  %v86 = vsub.s32 0, %v85
  %v87 = vrot.slane %v82, %v86
  %v89 = vmul.f32 %v66, %v87
  %v90 = vmul.f32 %v67, %v87
  %v91 = vmul.f32 %v68, %v87
  %v92 = vmul.f32 %v69, %v87
  %v93 = vmul.f32 %v70, %v87
  %v94 = vmul.f32 %v71, %v87
  %v95 = vmul.f32 %v72, %v87
  %v96 = vmul.f32 %v73, %v87
  %v97 = vmul.f32 %v74, %v87
  %v98 = vmul.f32 %v75, %v87
  %v99 = vmul.f32 %v76, %v87
  %v100 = vmul.f32 %v77, %v87
  %v101 = vmul.f32 %v78, %v87
  %v102 = vmul.f32 %v79, %v87
  %v103 = vmul.f32 %v80, %v87
  %v104 = vmul.f32 %v81, %v87
  %v105 = vld [vmem:[%s4] sm:$0x1]
  %v107 = vlaneseq
  %v108 = vshrl.u32 %v107, 7
  %v109 = vsub.s32 0, %v108
  %v110 = vrot.slane %v105, %v109
  %v112 = vadd.f32 %v89, %v110
  %v113 = vadd.f32 %v90, %v110
  %v114 = vadd.f32 %v91, %v110
  %v115 = vadd.f32 %v92, %v110
  %v116 = vadd.f32 %v93, %v110
  %v117 = vadd.f32 %v94, %v110
  %v118 = vadd.f32 %v95, %v110
  %v119 = vadd.f32 %v96, %v110
  %v120 = vadd.f32 %v97, %v110
  %v121 = vadd.f32 %v98, %v110
  %v122 = vadd.f32 %v99, %v110
  %v123 = vadd.f32 %v100, %v110
  %v124 = vadd.f32 %v101, %v110
  %v125 = vadd.f32 %v102, %v110
  %v126 = vadd.f32 %v103, %v110
  %v127 = vadd.f32 %v104, %v110
  %128 = vst [vmem:[%s5] sm:$0xff] %v112
  %129 = vst [vmem:[%s5 + $0x8] sm:$0xff] %v113
  %130 = vst [vmem:[%s5 + $0x10] sm:$0xff] %v114
  %131 = vst [vmem:[%s5 + $0x18] sm:$0xff] %v115
  %132 = vst [vmem:[%s5 + $0x20] sm:$0xff] %v116
  %133 = vst [vmem:[%s5 + $0x28] sm:$0xff] %v117
  %134 = vst [vmem:[%s5 + $0x30] sm:$0xff] %v118
  %135 = vst [vmem:[%s5 + $0x38] sm:$0xff] %v119
  %136 = vst [vmem:[%s5 + $0x40] sm:$0xff] %v120
  %137 = vst [vmem:[%s5 + $0x48] sm:$0xff] %v121
  %138 = vst [vmem:[%s5 + $0x50] sm:$0xff] %v122
  %139 = vst [vmem:[%s5 + $0x58] sm:$0xff] %v123
  %140 = vst [vmem:[%s5 + $0x60] sm:$0xff] %v124
  %141 = vst [vmem:[%s5 + $0x68] sm:$0xff] %v125
  %142 = vst [vmem:[%s5 + $0x70] sm:$0xff] %v126
  %143 = vst [vmem:[%s5 + $0x78] sm:$0xff] %v127
  // Predicated region
  $region22: #{conv_block.3} parent=0 // pred_check
    _
  $region23: #{conv_block.3} parent=0 // pred_check_branch
    %145 = sbr.rel (0) target = $region25
  $region24: #{conv_block.3} parent=0 // pred_region
    _
  $region25: #{conv_block.3} parent=0 // pred_fallthru
    _
  // Predicated region
  $region26: #{conv_block.3} parent=0 // pred_check
    _
  $region27: #{conv_block.3} parent=0 // pred_check_branch
    %147 = sbr.rel (0) target = $region29
  $region28: #{conv_block.3} parent=0 // pred_region
    _
  $region29: #{conv_block.3} parent=0 // pred_fallthru
    _

// kernel: conv_block.2
$region0: #{conv_block.2}
  #allocation0 [shape = 'u32[]', space=smem, size = 0x4, offset = 0x4, fixed_abs, tag = 'smem constant byte address 0x4 - core index']
  #allocation1 [shape = 'u32[144,128]{1,0:T(1,128)}', space=vmem, size = 0x12000, scoped, tag = 'internal scratch']
  %s0 = inlined_call_operand.vmem [shape: bf16[128,64], index: 0, kind: input, shape index: {}]
  %s1 = inlined_call_operand.vmem [shape: bf16[64,128], index: 1, kind: input, shape index: {}]
  %s2 = inlined_call_operand.vmem [shape: f32[1,128], index: 2, kind: input, shape index: {}]
  %s3 = inlined_call_operand.vmem [shape: f32[128,128], index: 3, kind: output, shape index: {0}]
  %s4 = inlined_call_operand.vmem [shape: f32[1,128], index: 4, kind: output, shape index: {1}]
  %s5 = inlined_call_operand.vmem [shape: f32[1,128], index: 5, kind: output, shape index: {2}]
  %6 = xla_tuple %s3, %s4, %s5
  %s7 = sld [smem:[#allocation0]]
  $region46: #{conv_block.2} parent=0
    _
  %s9 = ssub.s32 1, %s7
  %s10 = scalar_select 0, %s9, %s7
  // Predicated region
  $region2: #{conv_block.2} parent=0 // pred_check
    _
  $region3: #{conv_block.2} parent=0 // pred_check_branch
    %12 = sbr.rel (0) target = $region5
  $region4: #{conv_block.2} parent=0 // pred_region
    _
  $region5: #{conv_block.2} parent=0 // pred_fallthru
    _
  // Predicated region
  $region6: #{conv_block.2} parent=0 // pred_check
    _
  $region7: #{conv_block.2} parent=0 // pred_check_branch
    %14 = sbr.rel (0) target = $region9
  $region8: #{conv_block.2} parent=0 // pred_region
    _
  $region9: #{conv_block.2} parent=0 // pred_fallthru
    _
  // Predicated region
  $region10: #{conv_block.2} parent=0 // pred_check
    _
  $region11: #{conv_block.2} parent=0 // pred_check_branch
    %16 = sbr.rel (0) target = $region13
  $region12: #{conv_block.2} parent=0 // pred_region
    _
  $region13: #{conv_block.2} parent=0 // pred_fallthru
    _
  %v18 = vld [vmem:[%s0] sm:$0xf]
  %v19 = vld [vmem:[%s0 + $0x4] sm:$0xf]
  %v20 = vld [vmem:[%s0 + $0x8] sm:$0xf]
  %v21 = vld [vmem:[%s0 + $0xc] sm:$0xf]
  %v22 = vld [vmem:[%s0 + $0x10] sm:$0xf]
  %v23 = vld [vmem:[%s0 + $0x14] sm:$0xf]
  %v24 = vld [vmem:[%s0 + $0x18] sm:$0xf]
  %v25 = vld [vmem:[%s0 + $0x1c] sm:$0xf]
  %v26 = vld [vmem:[%s0 + $0x20] sm:$0xf]
  %v27 = vld [vmem:[%s0 + $0x24] sm:$0xf]
  %v28 = vld [vmem:[%s0 + $0x28] sm:$0xf]
  %v29 = vld [vmem:[%s0 + $0x2c] sm:$0xf]
  %v30 = vld [vmem:[%s0 + $0x30] sm:$0xf]
  %v31 = vld [vmem:[%s0 + $0x34] sm:$0xf]
  %v32 = vld [vmem:[%s0 + $0x38] sm:$0xf]
  %v33 = vld [vmem:[%s0 + $0x3c] sm:$0xf]
  %v34 = vld [vmem:[%s1] sm:$0xf]
  %v35 = vld [vmem:[%s1 + $0x4] sm:$0xf]
  %v36 = vld [vmem:[%s1 + $0x8] sm:$0xf]
  %v37 = vld [vmem:[%s1 + $0xc] sm:$0xf]
  %v38 = vld [vmem:[%s1 + $0x10] sm:$0xf]
  %v39 = vld [vmem:[%s1 + $0x14] sm:$0xf]
  %v40 = vld [vmem:[%s1 + $0x18] sm:$0xf]
  %v41 = vld [vmem:[%s1 + $0x1c] sm:$0xf]
  %v42 = vld [vmem:[%s2] sm:$0x1]
  %v44 = vlaneseq
  %v45 = vshrl.u32 %v44, 7
  %v46 = vsub.s32 0, %v45
  %v47 = vrot.slane %v42, %v46
  %v65 = vunpack.c.l.b16 %v18
  %v66 = vunpack.c.l.b16 %v19
  %v67 = vunpack.c.l.b16 %v20
  %v68 = vunpack.c.l.b16 %v21
  %v69 = vunpack.c.l.b16 %v22
  %v70 = vunpack.c.l.b16 %v23
  %v71 = vunpack.c.l.b16 %v24
  %v72 = vunpack.c.l.b16 %v25
  %v73 = vunpack.c.l.b16 %v26
  %v74 = vunpack.c.l.b16 %v27
  %v75 = vunpack.c.l.b16 %v28
  %v76 = vunpack.c.l.b16 %v29
  %v77 = vunpack.c.l.b16 %v30
  %v78 = vunpack.c.l.b16 %v31
  %v79 = vunpack.c.l.b16 %v32
  %v80 = vunpack.c.l.b16 %v33
  %v81 = vpack.c.b16 %v66, %v65
  %v82 = vpack.c.b16 %v68, %v67
  %v83 = vpack.c.b16 %v70, %v69
  %v84 = vpack.c.b16 %v72, %v71
  %v85 = vpack.c.b16 %v74, %v73
  %v86 = vpack.c.b16 %v76, %v75
  %v87 = vpack.c.b16 %v78, %v77
  %v88 = vpack.c.b16 %v80, %v79
  %v97 = vunpack.c.l.b16 %v34
  %v98 = vunpack.c.l.b16 %v35
  %v99 = vunpack.c.l.b16 %v36
  %v100 = vunpack.c.l.b16 %v37
  %v101 = vunpack.c.l.b16 %v38
  %v102 = vunpack.c.l.b16 %v39
  %v103 = vunpack.c.l.b16 %v40
  %v104 = vunpack.c.l.b16 %v41
  %v105 = vpack.c.b16 %v98, %v97
  %v106 = vpack.c.b16 %v100, %v99
  %v107 = vpack.c.b16 %v102, %v101
  %v108 = vpack.c.b16 %v104, %v103
  %vm113 = vcmask 523264
  %v115 = vsel %vm113, %v81, 0
  %v118 = vsel %vm113, %v82, 0
  %v121 = vsel %vm113, %v83, 0
  %v124 = vsel %vm113, %v84, 0
  %v127 = vsel %vm113, %v85, 0
  %v130 = vsel %vm113, %v86, 0
  %v133 = vsel %vm113, %v87, 0
  %v136 = vsel %vm113, %v88, 0
  %138 = vmatprep.subr.bf16.mxu0 0
  %139 = vmatpush1.bf16.msra.mxu0 %v105
  %140 = vmatprep.subr.bf16.mxu0 0
  %141 = vmatpush1.bf16.msra.mxu0 %v106
  %142 = vmatprep.subr.bf16.mxu0 0
  %143 = vmatpush1.bf16.msra.mxu0 %v107
  %144 = vmatprep.subr.bf16.mxu0 0
  %145 = vmatpush1.bf16.msra.mxu0 %v108
  %146 = vmatprep.subr.bf16.mxu0 0
  %147 = vmatpush1.bf16.msra.mxu0 0
  %148 = vmatprep.subr.bf16.mxu0 0
  %149 = vmatpush1.bf16.msra.mxu0 0
  %150 = vmatprep.subr.bf16.mxu0 0
  %151 = vmatpush1.bf16.msra.mxu0 0
  %152 = vmatprep.subr.bf16.mxu0 0
  %153 = vmatpush1.bf16.msra.mxu0 0
  %154 = vmatprep.subr.bf16.mxu0 0
  %155 = vmatpush1.bf16.msra.mxu0 0
  %156 = vmatprep.subr.bf16.mxu0 0
  %157 = vmatpush1.bf16.msra.mxu0 0
  %158 = vmatprep.subr.bf16.mxu0 0
  %159 = vmatpush1.bf16.msra.mxu0 0
  %160 = vmatprep.subr.bf16.mxu0 0
  %161 = vmatpush1.bf16.msra.mxu0 0
  %162 = vmatprep.subr.bf16.mxu0 0
  %163 = vmatpush1.bf16.msra.mxu0 0
  %164 = vmatprep.subr.bf16.mxu0 0
  %165 = vmatpush1.bf16.msra.mxu0 0
  %166 = vmatprep.subr.bf16.mxu0 0
  %167 = vmatpush1.bf16.msra.mxu0 0
  %168 = vmatprep.subr.bf16.mxu0 0
  %169 = vmatpush1.bf16.msra.mxu0 0
  %170 = vmatprep.mubr.bf16.mxu0 0
  %171 = vmatmul.mubr.bf16.gmra.mrb[0].mxu0 %v115
  %v172 = vpop.f32.mrb[0].mxu0
  %v173 = vadd.f32 %v47, %v172
  %v174 = vpop.f32.mrb[0].mxu0
  %v175 = vpop.f32.mrb[0].mxu0
  %v176 = vadd.f32 %v47, %v175
  %v177 = vpop.f32.mrb[0].mxu0
  %178 = vmatprep.mubr.bf16.mxu0 0
  %179 = vmatmul.mubr.bf16.gmra.mrb[0].mxu0 %v118
  %v180 = vpop.f32.mrb[0].mxu0
  %v181 = vadd.f32 %v47, %v180
  %v182 = vpop.f32.mrb[0].mxu0
  %v183 = vpop.f32.mrb[0].mxu0
  %v184 = vadd.f32 %v47, %v183
  %v185 = vpop.f32.mrb[0].mxu0
  %186 = vmatprep.mubr.bf16.mxu0 0
  %187 = vmatmul.mubr.bf16.gmra.mrb[0].mxu0 %v121
  %v188 = vpop.f32.mrb[0].mxu0
  %v189 = vadd.f32 %v47, %v188
  %v190 = vpop.f32.mrb[0].mxu0
  %v191 = vpop.f32.mrb[0].mxu0
  %v192 = vadd.f32 %v47, %v191
  %v193 = vpop.f32.mrb[0].mxu0
  %194 = vmatprep.mubr.bf16.mxu0 0
  %195 = vmatmul.mubr.bf16.gmra.mrb[0].mxu0 %v124
  %v196 = vpop.f32.mrb[0].mxu0
  %v197 = vadd.f32 %v47, %v196
  %v198 = vpop.f32.mrb[0].mxu0
  %v199 = vpop.f32.mrb[0].mxu0
  %v200 = vadd.f32 %v47, %v199
  %v201 = vpop.f32.mrb[0].mxu0
  %202 = vmatprep.mubr.bf16.mxu0 0
  %203 = vmatmul.mubr.bf16.gmra.mrb[0].mxu0 %v127
  %v204 = vpop.f32.mrb[0].mxu0
  %v205 = vadd.f32 %v47, %v204
  %v206 = vpop.f32.mrb[0].mxu0
  %v207 = vpop.f32.mrb[0].mxu0
  %v208 = vadd.f32 %v47, %v207
  %v209 = vpop.f32.mrb[0].mxu0
  %210 = vmatprep.mubr.bf16.mxu0 0
  %211 = vmatmul.mubr.bf16.gmra.mrb[0].mxu0 %v130
  %v212 = vpop.f32.mrb[0].mxu0
  %v213 = vadd.f32 %v47, %v212
  %v214 = vpop.f32.mrb[0].mxu0
  %v215 = vpop.f32.mrb[0].mxu0
  %v216 = vadd.f32 %v47, %v215
  %v217 = vpop.f32.mrb[0].mxu0
  %218 = vmatprep.mubr.bf16.mxu0 0
  %219 = vmatmul.mubr.bf16.gmra.mrb[0].mxu0 %v133
  %v220 = vpop.f32.mrb[0].mxu0
  %v221 = vadd.f32 %v47, %v220
  %v222 = vpop.f32.mrb[0].mxu0
  %v223 = vpop.f32.mrb[0].mxu0
  %v224 = vadd.f32 %v47, %v223
  %v225 = vpop.f32.mrb[0].mxu0
  %226 = vmatprep.mubr.bf16.mxu0 0
  %227 = vmatmul.mubr.bf16.gmra.mrb[0].mxu0 %v136
  %v228 = vpop.f32.mrb[0].mxu0
  %v229 = vadd.f32 %v47, %v228
  %v230 = vpop.f32.mrb[0].mxu0
  %v231 = vpop.f32.mrb[0].mxu0
  %v232 = vadd.f32 %v47, %v231
  %v233 = vpop.f32.mrb[0].mxu0
  %234 = vdwg.mxu0
  %vm235 = vcmp.ge.f32.partialorder %v173, 0.0
  %vm236 = vcmp.ge.f32.partialorder %v176, 0.0
  %vm237 = vcmp.ge.f32.partialorder %v181, 0.0
  %vm238 = vcmp.ge.f32.partialorder %v184, 0.0
  %vm239 = vcmp.ge.f32.partialorder %v189, 0.0
  %vm240 = vcmp.ge.f32.partialorder %v192, 0.0
  %vm241 = vcmp.ge.f32.partialorder %v197, 0.0
  %vm242 = vcmp.ge.f32.partialorder %v200, 0.0
  %vm243 = vcmp.ge.f32.partialorder %v205, 0.0
  %vm244 = vcmp.ge.f32.partialorder %v208, 0.0
  %vm245 = vcmp.ge.f32.partialorder %v213, 0.0
  %vm246 = vcmp.ge.f32.partialorder %v216, 0.0
  %vm247 = vcmp.ge.f32.partialorder %v221, 0.0
  %vm248 = vcmp.ge.f32.partialorder %v224, 0.0
  %vm249 = vcmp.ge.f32.partialorder %v229, 0.0
  %vm250 = vcmp.ge.f32.partialorder %v232, 0.0
  %v251 = vmul.f32 %v173, 0.2
  %v252 = vmul.f32 %v176, 0.2
  %v253 = vmul.f32 %v181, 0.2
  %v254 = vmul.f32 %v184, 0.2
  %v255 = vmul.f32 %v189, 0.2
  %v256 = vmul.f32 %v192, 0.2
  %v257 = vmul.f32 %v197, 0.2
  %v258 = vmul.f32 %v200, 0.2
  %v259 = vmul.f32 %v205, 0.2
  %v260 = vmul.f32 %v208, 0.2
  %v261 = vmul.f32 %v213, 0.2
  %v262 = vmul.f32 %v216, 0.2
  %v263 = vmul.f32 %v221, 0.2
  %v264 = vmul.f32 %v224, 0.2
  %v265 = vmul.f32 %v229, 0.2
  %v266 = vmul.f32 %v232, 0.2
  %v267 = vsel %vm235, %v173, %v251
  %v268 = vsel %vm236, %v176, %v252
  %v269 = vsel %vm237, %v181, %v253
  %v270 = vsel %vm238, %v184, %v254
  %v271 = vsel %vm239, %v189, %v255
  %v272 = vsel %vm240, %v192, %v256
  %v273 = vsel %vm241, %v197, %v257
  %v274 = vsel %vm242, %v200, %v258
  %v275 = vsel %vm243, %v205, %v259
  %v276 = vsel %vm244, %v208, %v260
  %v277 = vsel %vm245, %v213, %v261
  %v278 = vsel %vm246, %v216, %v262
  %v279 = vsel %vm247, %v221, %v263
  %v280 = vsel %vm248, %v224, %v264
  %v281 = vsel %vm249, %v229, %v265
  %v282 = vsel %vm250, %v232, %v266
  %283 = vst [vmem:[%s3] sm:$0xff] %v267
  %284 = vst [vmem:[%s3 + $0x8] sm:$0xff] %v268
  %285 = vst [vmem:[%s3 + $0x10] sm:$0xff] %v269
  %286 = vst [vmem:[%s3 + $0x18] sm:$0xff] %v270
  %287 = vst [vmem:[%s3 + $0x20] sm:$0xff] %v271
  %288 = vst [vmem:[%s3 + $0x28] sm:$0xff] %v272
  %289 = vst [vmem:[%s3 + $0x30] sm:$0xff] %v273
  %290 = vst [vmem:[%s3 + $0x38] sm:$0xff] %v274
  %291 = vst [vmem:[%s3 + $0x40] sm:$0xff] %v275
  %292 = vst [vmem:[%s3 + $0x48] sm:$0xff] %v276
  %293 = vst [vmem:[%s3 + $0x50] sm:$0xff] %v277
  %294 = vst [vmem:[%s3 + $0x58] sm:$0xff] %v278
  %295 = vst [vmem:[%s3 + $0x60] sm:$0xff] %v279
  %296 = vst [vmem:[%s3 + $0x68] sm:$0xff] %v280
  %297 = vst [vmem:[%s3 + $0x70] sm:$0xff] %v281
  %298 = vst [vmem:[%s3 + $0x78] sm:$0xff] %v282
  %p299 = scmp.eq.s32.totalorder 0, 0
  // Predicated region
  $region14: #{conv_block.2} parent=0 // pred_check
    %p300 = pneg %p299
  $region15: #{conv_block.2} parent=0 // pred_check_branch
    %302 = sbr.rel (%p300) target = $region17
  $region16: #{conv_block.2} parent=0 // pred_region
    %303 = vst [vmem:[%s4] sm:$0x1] 0.0
    %304 = vst [vmem:[%s5] sm:$0x1] 0.0
  $region17: #{conv_block.2} parent=0 // pred_fallthru
    _
  %v305 = vld [vmem:[%s4] sm:$0x1]
  %v306 = vadd.f32 %v267, %v268
  %v307 = vadd.f32 %v306, %v269
  %v308 = vadd.f32 %v307, %v270
  %v309 = vadd.f32 %v308, %v271
  %v310 = vadd.f32 %v309, %v272
  %v311 = vadd.f32 %v310, %v273
  %v312 = vadd.f32 %v311, %v274
  %v313 = vadd.f32 %v312, %v275
  %v314 = vadd.f32 %v313, %v276
  %v315 = vadd.f32 %v314, %v277
  %v316 = vadd.f32 %v315, %v278
  %v317 = vadd.f32 %v316, %v279
  %v318 = vadd.f32 %v317, %v280
  %v319 = vadd.f32 %v318, %v281
  %v320 = vadd.f32 %v319, %v282
  %v321 = vrot.slane %v320, 4
  %v322 = vadd.f32 %v320, %v321
  %v323 = vrot.slane %v322, 2
  %v324 = vadd.f32 %v322, %v323
  %v325 = vrot.slane %v324, 1
  %v326 = vadd.f32 %v324, %v325
  %v327 = vadd.f32 %v305, %v326
  %328 = vst [vmem:[%s4] sm:$0x1] %v327
  %v329 = vld [vmem:[%s5] sm:$0x1]
  %v330 = vmul.f32 %v267, %v267
  %v331 = vmul.f32 %v268, %v268
  %v332 = vmul.f32 %v269, %v269
  %v333 = vmul.f32 %v270, %v270
  %v334 = vmul.f32 %v271, %v271
  %v335 = vmul.f32 %v272, %v272
  %v336 = vmul.f32 %v273, %v273
  %v337 = vmul.f32 %v274, %v274
  %v338 = vmul.f32 %v275, %v275
  %v339 = vmul.f32 %v276, %v276
  %v340 = vmul.f32 %v277, %v277
  %v341 = vmul.f32 %v278, %v278
  %v342 = vmul.f32 %v279, %v279
  %v343 = vmul.f32 %v280, %v280
  %v344 = vmul.f32 %v281, %v281
  %v345 = vmul.f32 %v282, %v282
  %v346 = vadd.f32 %v330, %v331
  %v347 = vadd.f32 %v346, %v332
  %v348 = vadd.f32 %v347, %v333
  %v349 = vadd.f32 %v348, %v334
  %v350 = vadd.f32 %v349, %v335
  %v351 = vadd.f32 %v350, %v336
  %v352 = vadd.f32 %v351, %v337
  %v353 = vadd.f32 %v352, %v338
  %v354 = vadd.f32 %v353, %v339
  %v355 = vadd.f32 %v354, %v340
  %v356 = vadd.f32 %v355, %v341
  %v357 = vadd.f32 %v356, %v342
  %v358 = vadd.f32 %v357, %v343
  %v359 = vadd.f32 %v358, %v344
  %v360 = vadd.f32 %v359, %v345
  %v361 = vrot.slane %v360, 4
  %v362 = vadd.f32 %v360, %v361
  %v363 = vrot.slane %v362, 2
  %v364 = vadd.f32 %v362, %v363
  %v365 = vrot.slane %v364, 1
  %v366 = vadd.f32 %v364, %v365
  %v367 = vadd.f32 %v329, %v366
  %368 = vst [vmem:[%s5] sm:$0x1] %v367
  // Predicated region
  $region18: #{conv_block.2} parent=0 // pred_check
    %p369 = pneg %p299
  $region19: #{conv_block.2} parent=0 // pred_check_branch
    %371 = sbr.rel (%p369) target = $region21
  $region20: #{conv_block.2} parent=0 // pred_region
    %v372 = vld [vmem:[%s4] sm:$0x1]
    %v373 = vrcp.pop 128.0
    %v374 = vmul.f32 %v372, %v373
    %v375 = vld [vmem:[%s5] sm:$0x1]
    %v376 = vmul.f32 %v375, %v373
    %v377 = vmul.f32 %v374, %v374
    %v378 = vsub.f32 %v376, %v377
    %379 = vst [vmem:[%s4] sm:$0x1] %v374
    %v380 = vadd.f32 %v378, 1e-05
    %v381 = vrsqrt.pop %v380
    %382 = vst [vmem:[%s5] sm:$0x1] %v381
  $region21: #{conv_block.2} parent=0 // pred_fallthru
    _
  // Predicated region
  $region22: #{conv_block.2} parent=0 // pred_check
    _
  $region23: #{conv_block.2} parent=0 // pred_check_branch
    %384 = sbr.rel (0) target = $region25
  $region24: #{conv_block.2} parent=0 // pred_region
    _
  $region25: #{conv_block.2} parent=0 // pred_fallthru
    _
  // Predicated region
  $region26: #{conv_block.2} parent=0 // pred_check
    _
  $region27: #{conv_block.2} parent=0 // pred_check_branch
    %386 = sbr.rel (0) target = $region29
  $region28: #{conv_block.2} parent=0 // pred_region
    _
  $region29: #{conv_block.2} parent=0 // pred_fallthru
    _
  // Predicated region
  $region30: #{conv_block.2} parent=0 // pred_check
    _
  $region31: #{conv_block.2} parent=0 // pred_check_branch
    %388 = sbr.rel (0) target = $region33
  $region32: #{conv_block.2} parent=0 // pred_region
    _
  $region33: #{conv_block.2} parent=0 // pred_fallthru
    _
  // Predicated region
  $region34: #{conv_block.2} parent=0 // pred_check
    _
  $region35: #{conv_block.2} parent=0 // pred_check_branch
    %390 = sbr.rel (0) target = $region37
  $region36: #{conv_block.2} parent=0 // pred_region
    _
  $region37: #{conv_block.2} parent=0 // pred_fallthru
    _
  // Predicated region
  $region38: #{conv_block.2} parent=0 // pred_check
    _
  $region39: #{conv_block.2} parent=0 // pred_check_branch
    %392 = sbr.rel (0) target = $region41
  $region40: #{conv_block.2} parent=0 // pred_region
    _
  $region41: #{conv_block.2} parent=0 // pred_fallthru
    _
  // Predicated region
  $region42: #{conv_block.2} parent=0 // pred_check
    _
  $region43: #{conv_block.2} parent=0 // pred_check_branch
    %394 = sbr.rel (0) target = $region45
  $region44: #{conv_block.2} parent=0 // pred_region
    _
  $region45: #{conv_block.2} parent=0 // pred_fallthru
    _

</llo_original>
